<compile_context>
chip_gen: v6e
topology: v6e:2x2x1
jax: 0.10.0
libtpu: 0.0.40
codegen_flags: <defaults>
</compile_context>

<pallas_src>
import functools

import jax
import jax.numpy as jnp
from jax.experimental import pallas as pl
from jax.experimental.pallas import tpu as pltpu


def _round_up(x, m):
    return (x + m - 1) // m * m


def _gelu_exact(x):
    # torch.nn.GELU default is the exact (erf-based) GELU.
    return 0.5 * x * (1.0 + jax.lax.erf(x * 0.7071067811865476))


def mlp_kernel(x_ref, w1_ref, b1_ref, w2_ref, b2_ref, o_ref):
    # fc1 (bf16 MXU matmul, f32 accumulate) + bias, exact GELU.
    z = jnp.dot(x_ref[...], w1_ref[...],
                preferred_element_type=jnp.float32) + b1_ref[...]
    h = _gelu_exact(z).astype(jnp.bfloat16)

    # drop1: p = 0.0 -> identity.
    # TODO(synk): dropout with p > 0 in training mode would need pltpu.prng_* here.

    # Combined second stage: [fc2 | identity pass-through] as one matmul.
    # pos_bias (and b2) are already folded into b2_ref in the wrapper.
    y = jnp.dot(h, w2_ref[...],
                preferred_element_type=jnp.float32) + b2_ref[...]

    # drop2: identity.
    o_ref[...] = y.astype(o_ref.dtype)


def prepare_mlp_params(w1, b1, w2, b2, pos_bias=None, *, part_features,
                       pos_scale, train_scale=1.0):
    """One-time parameter prep (transpose, pad, fuse pos/bias, cast to bf16).

    w1: (hidden, in) torch layout, w2: (out_rest, in_rest) torch layout.
    Returns (params_dict, out_features).
    """
    hidden, _c_in = w1.shape
    in_rest = hidden - part_features
    out_rest = w2.shape[0]
    out_features = out_rest + part_features

    hidden_p = _round_up(hidden, 128)        # lane-align fc1 output / fc2 K dim
    out_p = _round_up(out_features, 128)     # lane-dense output store

    w1_f = jnp.asarray(w1, jnp.float32)
    b1_f = jnp.asarray(b1, jnp.float32)
    w2_f = jnp.asarray(w2, jnp.float32)
    b2_f = jnp.asarray(b2, jnp.float32)

    w1t = jnp.zeros((w1_f.shape[1], hidden_p), jnp.float32)
    w1t = w1t.at[:, :hidden].set(w1_f.T)
    b1p = jnp.zeros((1, hidden_p), jnp.float32).at[0, :hidden].set(b1_f)

    # Combined second-stage weight: [W2^T (zero-padded) | identity pass-through]
    w2c = jnp.zeros((hidden_p, out_p), jnp.float32)
    w2c = w2c.at[:in_rest, :out_rest].set(w2_f.T)
    if part_features > 0:
        w2c = w2c.at[in_rest:hidden, out_rest:out_features].set(
            jnp.eye(part_features, dtype=jnp.float32))

    b2c = jnp.zeros((1, out_p), jnp.float32).at[0, :out_rest].set(b2_f)
    if pos_scale > 0:
        # Module does: h = gelu(fc1(x)); h = h + train_scale*pos_bias; split/fc2.
        # (h + pos) @ Wc + b == h @ Wc + (pos @ Wc + b)  -> fold pos into the bias.
        pos = train_scale * jnp.asarray(pos_bias, jnp.float32)
        pos_p = jnp.zeros((1, hidden_p), jnp.float32).at[0, :hidden].set(pos)
        b2c = b2c + pos_p @ w2c

    params = dict(
        w1t=w1t.astype(jnp.bfloat16),   # (c_in, hidden_p) bf16, resident
        b1=b1p,                         # (1, hidden_p) f32
        w2c=w2c.astype(jnp.bfloat16),   # (hidden_p, out_p) bf16, resident
        b2c=b2c,                        # (1, out_p) f32 (b2 + pos folded)
    )
    return params, out_features


@functools.partial(jax.jit, static_argnames=("out_features", "tile_m"))
def mlp_forward(x, w1t, b1, w2c, b2c, *, out_features, tile_m=256):
    """x: (B, N, C_in) float32; weights prepared by prepare_mlp_params."""
    B, N, c_in = x.shape
    rows = B * N
    hidden_p = w1t.shape[1]
    out_p = w2c.shape[1]

    # Large row tiles for MXU utilization; shrink (8-aligned) for tiny inputs
    # and pad rows so the grid divides evenly (no % assert).
    tm = min(tile_m, _round_up(rows, 8))
    rows_p = _round_up(rows, tm)

    x2 = x.reshape(rows, c_in).astype(jnp.bfloat16)
    if rows_p != rows:
        x2 = jnp.pad(x2, ((0, rows_p - rows), (0, 0)))

    grid = (rows_p // tm,)

    flops = 2 * rows_p * (c_in * hidden_p + hidden_p * out_p)
    bytes_accessed = (x2.size * 2 + w1t.size * 2 + w2c.size * 2
                      + b1.size * 4 + b2c.size * 4 + rows_p * out_p * 4)

    # VMEM budget: double-buffered x/out tiles + resident weights (headroom,
    # capped below v7x's 64 MiB physical VMEM).
    vmem_need = (2 * tm * c_in * 2 + 2 * tm * out_p * 4
                 + 2 * (c_in * hidden_p * 2 + hidden_p * 4
                        + hidden_p * out_p * 2 + out_p * 4))
    vmem_limit = int(min(max(32 << 20, int(vmem_need * 1.5)), 64 << 20))

    out2 = pl.pallas_call(
        mlp_kernel,
        out_shape=jax.ShapeDtypeStruct((rows_p, out_p), jnp.float32),
        grid=grid,
        in_specs=[
            pl.BlockSpec((tm, c_in), lambda i: (i, 0)),         # x rows (bf16)
            pl.BlockSpec((c_in, hidden_p), lambda i: (0, 0)),   # W1^T resident
            pl.BlockSpec((1, hidden_p), lambda i: (0, 0)),      # b1 (f32)
            pl.BlockSpec((hidden_p, out_p), lambda i: (0, 0)),  # [W2^T | I] resident
            pl.BlockSpec((1, out_p), lambda i: (0, 0)),         # b2 + folded pos (f32)
        ],
        out_specs=pl.BlockSpec((tm, out_p), lambda i: (i, 0)),  # lane-dense store
        compiler_params=pltpu.CompilerParams(
            dimension_semantics=("parallel",),                  # megacore-shardable
            vmem_limit_bytes=vmem_limit),
        cost_estimate=pl.CostEstimate(
            flops=flops,
            transcendentals=rows_p * hidden_p,
            bytes_accessed=bytes_accessed),
    )(x2, w1t, b1, w2c, b2c)

    return out2[:rows, :out_features].reshape(B, N, out_features)


def _reference(x, w1, b1, w2, b2, pos_bias, *, part_features, pos_scale,
               train_scale=1.0):
    """Pure-JAX f32 mirror of the torch module's forward."""
    h = jnp.einsum("bnc,hc->bnh", x, w1) + b1
    h = _gelu_exact(h)
    if pos_scale > 0:
        h = h + train_scale * pos_bias
    in_rest = w1.shape[0] - part_features
    if part_features > 0:
        h1, h2 = h[..., :in_rest], h[..., in_rest:]
        y1 = jnp.einsum("bnr,or->bno", h1, w2) + b2
        return jnp.concatenate([y1, h2], axis=-1)
    return jnp.einsum("bnr,or->bno", h, w2) + b2


if __name__ == "__main__":
    # Config 1: split=0.25, pos_scale=0.5 (exercises pos add + split/concat).
    in_features = 16
    hidden_features = 32
    out_features = 16
    split = 0.25
    pos_scale = 0.5
    part_features = int(out_features * split)                 # 4
    rest_features = hidden_features - part_features           # 28
    out_rest = out_features - part_features                   # 12

    key = jax.random.PRNGKey(0)
    k_x, k_w1, k_b1, k_w2, k_b2 = jax.random.split(key, 5)

    B, N = 2, 8
    x = jax.random.normal(k_x, (B, N, in_features), jnp.float32)

    # Deterministic synthetic parameters (torch nn.Linear weight layout: (out, in)).
    w1 = 0.05 * jax.random.normal(k_w1, (hidden_features, in_features), jnp.float32)
    b1 = 0.05 * jax.random.normal(k_b1, (hidden_features,), jnp.float32)
    w2 = 0.05 * jax.random.normal(k_w2, (out_rest, rest_features), jnp.float32)
    b2 = 0.05 * jax.random.normal(k_b2, (out_rest,), jnp.float32)
    pos_bias = jnp.linspace(0.0, pos_scale, hidden_features, dtype=jnp.float32)

    params, out_f = prepare_mlp_params(
        w1, b1, w2, b2, pos_bias,
        part_features=part_features, pos_scale=pos_scale)
    out = mlp_forward(x, params["w1t"], params["b1"], params["w2c"], params["b2c"],
                      out_features=out_f)
    out = jax.block_until_ready(out)

    ref = _reference(x, w1, b1, w2, b2, pos_bias,
                     part_features=part_features, pos_scale=pos_scale)
    assert out.shape == (B, N, out_features)
    # bf16 matmul inputs vs pure-f32 reference -> loosen tolerance accordingly.
    assert jnp.allclose(out, ref, atol=2e-2, rtol=2e-2), \
        float(jnp.max(jnp.abs(out - ref)))

    # Config 2: split=0.0, pos_scale=0.0 (plain MLP path).
    w2b = 0.05 * jax.random.normal(k_w2, (out_features, hidden_features), jnp.float32)
    b2b = 0.05 * jax.random.normal(k_b2, (out_features,), jnp.float32)
    params2, out_f2 = prepare_mlp_params(
        w1, b1, w2b, b2b, None, part_features=0, pos_scale=0.0)
    out2 = mlp_forward(x, params2["w1t"], params2["b1"], params2["w2c"],
                       params2["b2c"], out_features=out_f2)
    out2 = jax.block_until_ready(out2)
    ref2 = _reference(x, w1, b1, w2b, b2b, None, part_features=0, pos_scale=0.0)
    assert out2.shape == (B, N, out_features)
    assert jnp.allclose(out2, ref2, atol=2e-2, rtol=2e-2), \
        float(jnp.max(jnp.abs(out2 - ref2)))

    print("KERNEL_OK")
</pallas_src>

<mosaic_0001>
module attributes {stable_mosaic.version = 11 : i64} {
  func.func @mlp_kernel(%arg0: i32, %arg1: memref<16x16xbf16, #tpu.memory_space<vmem>>, %arg2: memref<16x128xbf16, #tpu.memory_space<vmem>>, %arg3: memref<1x128xf32, #tpu.memory_space<vmem>>, %arg4: memref<128x128xbf16, #tpu.memory_space<vmem>>, %arg5: memref<1x128xf32, #tpu.memory_space<vmem>>, %arg6: memref<16x128xf32, #tpu.memory_space<vmem>>) attributes {dimension_semantics = [#tpu.dimension_semantics<parallel>], iteration_bounds = array<i64: 1>, scalar_prefetch = 0 : i64, scratch_operands = 0 : i64, tpu.core_type = #tpu.core_type<tc>, window_params = [{transform_indices = @transform_0, window_bounds = array<i64: 16, 16>}, {pipeline_mode = #tpu.pipeline_mode<synchronous>, transform_indices = @transform_1, window_bounds = array<i64: 16, 128>}, {pipeline_mode = #tpu.pipeline_mode<synchronous>, transform_indices = @transform_2, window_bounds = array<i64: 1, 128>}, {pipeline_mode = #tpu.pipeline_mode<synchronous>, transform_indices = @transform_3, window_bounds = array<i64: 128, 128>}, {pipeline_mode = #tpu.pipeline_mode<synchronous>, transform_indices = @transform_4, window_bounds = array<i64: 1, 128>}, {transform_indices = @transform_5, window_bounds = array<i64: 16, 128>}]} {
    %c0 = arith.constant 0 : index
    %c0_0 = arith.constant 0 : index
    %0 = vector.load %arg1[%c0, %c0_0] : memref<16x16xbf16, #tpu.memory_space<vmem>>, vector<16x16xbf16>
    %c0_1 = arith.constant 0 : index
    %c0_2 = arith.constant 0 : index
    %1 = vector.load %arg2[%c0_1, %c0_2] : memref<16x128xbf16, #tpu.memory_space<vmem>>, vector<16x128xbf16>
    %cst = arith.constant dense<0.000000e+00> : vector<16x128xf32>
    %2 = tpu.matmul %0, %1, %cst {dimension_numbers = #tpu.dot_dimension_numbers<[1], [0], [0], [1], [0, 0, 1, 1], [], []>} : vector<16x16xbf16>, vector<16x128xbf16>, vector<16x128xf32> -> vector<16x128xf32>
    %c0_3 = arith.constant 0 : index
    %c0_4 = arith.constant 0 : index
    %3 = vector.load %arg3[%c0_3, %c0_4] : memref<1x128xf32, #tpu.memory_space<vmem>>, vector<1x128xf32>
    %4 = vector.broadcast %3 : vector<1x128xf32> to vector<16x128xf32>
    %5 = arith.addf %2, %4 : vector<16x128xf32>
    %cst_5 = arith.constant 5.000000e-01 : f32
    %6 = vector.broadcast %cst_5 : f32 to vector<16x128xf32>
    %7 = arith.mulf %6, %5 : vector<16x128xf32>
    %cst_6 = arith.constant 0.707106769 : f32
    %8 = vector.broadcast %cst_6 : f32 to vector<16x128xf32>
    %9 = arith.mulf %5, %8 : vector<16x128xf32>
    %10 = math.erf %9 : vector<16x128xf32>
    %cst_7 = arith.constant 1.000000e+00 : f32
    %11 = vector.broadcast %cst_7 : f32 to vector<16x128xf32>
    %12 = arith.addf %11, %10 : vector<16x128xf32>
    %13 = arith.mulf %7, %12 : vector<16x128xf32>
    %14 = arith.truncf %13 : vector<16x128xf32> to vector<16x128xbf16>
    %c0_8 = arith.constant 0 : index
    %c0_9 = arith.constant 0 : index
    %15 = vector.load %arg4[%c0_8, %c0_9] : memref<128x128xbf16, #tpu.memory_space<vmem>>, vector<128x128xbf16>
    %cst_10 = arith.constant dense<0.000000e+00> : vector<16x128xf32>
    %16 = tpu.matmul %14, %15, %cst_10 {dimension_numbers = #tpu.dot_dimension_numbers<[1], [0], [0], [1], [0, 0, 1, 1], [], []>} : vector<16x128xbf16>, vector<128x128xbf16>, vector<16x128xf32> -> vector<16x128xf32>
    %c0_11 = arith.constant 0 : index
    %c0_12 = arith.constant 0 : index
    %17 = vector.load %arg5[%c0_11, %c0_12] : memref<1x128xf32, #tpu.memory_space<vmem>>, vector<1x128xf32>
    %18 = vector.broadcast %17 : vector<1x128xf32> to vector<16x128xf32>
    %19 = arith.addf %16, %18 : vector<16x128xf32>
    %c0_13 = arith.constant 0 : index
    %c0_14 = arith.constant 0 : index
    %20 = vector.load %arg6[%c0_13, %c0_14] : memref<16x128xf32, #tpu.memory_space<vmem>>, vector<16x128xf32>
    tpu.vector_store %arg6[%c0_13, %c0_14], %19 {strides = array<i32>} : memref<16x128xf32, #tpu.memory_space<vmem>>, vector<16x128xf32>,
    return
  }
  func.func @transform_0(%arg0: i32) -> (i32, i32) {
    %c0_i32 = arith.constant 0 : i32
    %c0_i32_0 = arith.constant 0 : i32
    return %arg0, %c0_i32 : i32, i32
  }
  func.func @transform_1(%arg0: i32) -> (i32, i32) {
    %c0_i32 = arith.constant 0 : i32
    %c0_i32_0 = arith.constant 0 : i32
    %c0_i32_1 = arith.constant 0 : i32
    return %c0_i32, %c0_i32_0 : i32, i32
  }
  func.func @transform_2(%arg0: i32) -> (i32, i32) {
    %c0_i32 = arith.constant 0 : i32
    %c0_i32_0 = arith.constant 0 : i32
    %c0_i32_1 = arith.constant 0 : i32
    return %c0_i32, %c0_i32_0 : i32, i32
  }
  func.func @transform_3(%arg0: i32) -> (i32, i32) {
    %c0_i32 = arith.constant 0 : i32
    %c0_i32_0 = arith.constant 0 : i32
    %c0_i32_1 = arith.constant 0 : i32
    return %c0_i32, %c0_i32_0 : i32, i32
  }
  func.func @transform_4(%arg0: i32) -> (i32, i32) {
    %c0_i32 = arith.constant 0 : i32
    %c0_i32_0 = arith.constant 0 : i32
    %c0_i32_1 = arith.constant 0 : i32
    return %c0_i32, %c0_i32_0 : i32, i32
  }
  func.func @transform_5(%arg0: i32) -> (i32, i32) {
    %c0_i32 = arith.constant 0 : i32
    %c0_i32_0 = arith.constant 0 : i32
    return %arg0, %c0_i32 : i32, i32
  }
}

</mosaic_0001>

<llo_original>
// kernel: mlp_forward.1
$region0: #{mlp_forward.1}
  #allocation0 [shape = 'u32[]', space=smem, size = 0x4, offset = 0x4, fixed_abs, tag = 'smem constant byte address 0x4 - core index']
  #allocation1 [shape = 'u32[144,128]{1,0:T(1,128)}', space=vmem, size = 0x12000, scoped, tag = 'internal scratch']
  %s0 = inlined_call_operand.vmem [shape: bf16[16,16], index: 0, kind: input, shape index: {}]
  %s1 = inlined_call_operand.vmem [shape: bf16[16,128], index: 1, kind: input, shape index: {}]
  %s2 = inlined_call_operand.vmem [shape: f32[1,128], index: 2, kind: input, shape index: {}]
  %s3 = inlined_call_operand.hbm [shape: bf16[128,128], index: 3, kind: input, shape index: {}]
  %s4 = inlined_call_operand.vmem [shape: f32[1,128], index: 4, kind: input, shape index: {}]
  %s5 = inlined_call_operand.vmem [shape: f32[16,128], index: 5, kind: output, shape index: {}]
  %s6 = sld [smem:[#allocation0]]
  $region34: #{mlp_forward.1} parent=0
    _
  %s8 = ssub.s32 1, %s6
  %s9 = scalar_select 0, %s8, %s6
  $region1: #{mlp_forward.1} parent=0
    #allocation2 [shape = 'u8[32768]{0}', space=vmem, size = 0x8000, scoped, tag = 'input window, operand 3, single buffered']
    #allocation3 [shape = 's32[1]{0}', space=sflag, size = 0x4, scoped, tag = 'scoped memory for mlp_forward.1']
    %10 = vsyncpa [#allocation3], 0
    // Predicated region
    $region2: #{mlp_forward.1} parent=1 // pred_check
      _
    $region3: #{mlp_forward.1} parent=1 // pred_check_branch
      %12 = sbr.rel (0) target = $region5
    $region4: #{mlp_forward.1} parent=1 // pred_region
      _
    $region5: #{mlp_forward.1} parent=1 // pred_fallthru
      _
    // Predicated region
    $region6: #{mlp_forward.1} parent=1 // pred_check
      _
    $region7: #{mlp_forward.1} parent=1 // pred_check_branch
      %14 = sbr.rel (0) target = $region9
    $region8: #{mlp_forward.1} parent=1 // pred_region
      _
    $region9: #{mlp_forward.1} parent=1 // pred_fallthru
      _
    // Predicated region
    $region10: #{mlp_forward.1} parent=1 // pred_check
      _
    $region11: #{mlp_forward.1} parent=1 // pred_check_branch
      %16 = sbr.rel (0) target = $region13
    $region12: #{mlp_forward.1} parent=1 // pred_region
      _
    $region13: #{mlp_forward.1} parent=1 // pred_fallthru
      _
    // Predicated region
    $region14: #{mlp_forward.1} parent=1 // pred_check
      _
    $region15: #{mlp_forward.1} parent=1 // pred_check_branch
      %18 = sbr.rel (0) target = $region17
    $region16: #{mlp_forward.1} parent=1 // pred_region
      %s20 = ssub.s32 1024, 1024
      %21 = vsyncadd [#allocation3], %s20
      %s22 = sshll.u32 [#allocation2], 4
      %s23 = int_to_ptr.vmem [resolvable:$true] %s22
      %28 = dma.hbm_to_vmem [thread:$0]  %s3, 1024, %s23, [#allocation3], 64, 64, 4
    $region17: #{mlp_forward.1} parent=1 // pred_fallthru
      _
    // Predicated region
    $region18: #{mlp_forward.1} parent=1 // pred_check
      _
    $region19: #{mlp_forward.1} parent=1 // pred_check_branch
      %30 = sbr.rel (0) target = $region21
    $region20: #{mlp_forward.1} parent=1 // pred_region
      _
    $region21: #{mlp_forward.1} parent=1 // pred_fallthru
      _
    // Predicated region
    $region22: #{mlp_forward.1} parent=1 // pred_check
      _
    $region23: #{mlp_forward.1} parent=1 // pred_check_branch
      %32 = sbr.rel (0) target = $region25
    $region24: #{mlp_forward.1} parent=1 // pred_region
      %33 = dma.done [#allocation3], 1024
    $region25: #{mlp_forward.1} parent=1 // pred_fallthru
      _
    %v35 = vld [vmem:[%s0] sm:$0xf]
    %v36 = vld [vmem:[%s0 + $0x4] sm:$0xf]
    %v37 = vld [vmem:[%s1] sm:$0xf]
    %v38 = vld [vmem:[%s1 + $0x4] sm:$0xf]
    %v39 = vld [vmem:[%s2] sm:$0x1]
    %v41 = vlaneseq
    %v42 = vshrl.u32 %v41, 7
    %v43 = vsub.s32 0, %v42
    %v44 = vrot.slane %v39, %v43
    %v48 = vunpack.c.l.b16 %v35
    %v49 = vunpack.c.l.b16 %v36
    %v50 = vpack.c.b16 %v49, %v48
    %v53 = vunpack.c.l.b16 %v37
    %v54 = vunpack.c.l.b16 %v38
    %v55 = vpack.c.b16 %v54, %v53
    %vm57 = vcmask 130048
    %v59 = vsel %vm57, %v50, 0
    %61 = vmatprep.subr.bf16.mxu0 0
    %62 = vmatpush1.bf16.msra.mxu0 0
    %63 = vmatprep.subr.bf16.mxu0 0
    %64 = vmatpush1.bf16.msra.mxu0 0
    %65 = vmatprep.subr.bf16.mxu0 0
    %66 = vmatpush1.bf16.msra.mxu0 0
    %67 = vmatprep.subr.bf16.mxu0 0
    %68 = vmatpush1.bf16.msra.mxu0 0
    %69 = vmatprep.subr.bf16.mxu0 0
    %70 = vmatpush1.bf16.msra.mxu0 0
    %71 = vmatprep.subr.bf16.mxu0 0
    %72 = vmatpush1.bf16.msra.mxu0 0
    %73 = vmatprep.subr.bf16.mxu0 0
    %74 = vmatpush1.bf16.msra.mxu0 0
    %75 = vmatprep.subr.bf16.mxu0 0
    %76 = vmatpush1.bf16.msra.mxu0 %v55
    %77 = vmatprep.subr.bf16.mxu0 0
    %78 = vmatpush2.bf16.msra.mxu0 0
    %79 = vmatprep.subr.bf16.mxu0 0
    %80 = vmatpush2.bf16.msra.mxu0 0
    %81 = vmatprep.subr.bf16.mxu0 0
    %82 = vmatpush2.bf16.msra.mxu0 0
    %83 = vmatprep.subr.bf16.mxu0 0
    %84 = vmatpush2.bf16.msra.mxu0 0
    %85 = vmatprep.subr.bf16.mxu0 0
    %86 = vmatpush2.bf16.msra.mxu0 0
    %87 = vmatprep.subr.bf16.mxu0 0
    %88 = vmatpush2.bf16.msra.mxu0 0
    %89 = vmatprep.subr.bf16.mxu0 0
    %90 = vmatpush2.bf16.msra.mxu0 0
    %91 = vmatprep.subr.bf16.mxu0 0
    %92 = vmatpush2.bf16.msra.mxu0 0
    %93 = vmatprep.mubr.bf16.mxu0 0
    %94 = vmatmul.mubr.bf16.gmra.mxu0 %v59
    %v95 = vpop.f32.mrf.mxu0
    %v96 = vadd.f32 %v44, %v95
    %v97 = vpop.f32.mrf.mxu0
    %v98 = vpop.f32.mrf.mxu0
    %v99 = vadd.f32 %v44, %v98
    %v100 = vpop.f32.mrf.mxu0
    %101 = vdwg.mxu0
    %v102 = vmul.f32 %v96, 0.5
    %v103 = vmul.f32 %v99, 0.5
    %v104 = vmul.f32 %v96, 0.70710677
    %v105 = vmul.f32 %v99, 0.70710677
    %v106 = verf.f32.pop %v104
    %v107 = verf.f32.pop %v105
    %v108 = vadd.f32 %v106, 1.0
    %v109 = vadd.f32 %v107, 1.0
    %v110 = vmul.f32 %v102, %v108
    %v111 = vmul.f32 %v103, %v109
    %v112 = vpack.c.bf16 %v111, %v110
    %v113 = vld [vmem:[#allocation2] sm:$0xf]
    %v114 = vld [vmem:[#allocation2 + $0x4] sm:$0xf]
    %v115 = vld [vmem:[#allocation2 + $0x8] sm:$0xf]
    %v116 = vld [vmem:[#allocation2 + $0xc] sm:$0xf]
    %v117 = vld [vmem:[#allocation2 + $0x10] sm:$0xf]
    %v118 = vld [vmem:[#allocation2 + $0x14] sm:$0xf]
    %v119 = vld [vmem:[#allocation2 + $0x18] sm:$0xf]
    %v120 = vld [vmem:[#allocation2 + $0x1c] sm:$0xf]
    %v121 = vld [vmem:[#allocation2 + $0x20] sm:$0xf]
    %v122 = vld [vmem:[#allocation2 + $0x24] sm:$0xf]
    %v123 = vld [vmem:[#allocation2 + $0x28] sm:$0xf]
    %v124 = vld [vmem:[#allocation2 + $0x2c] sm:$0xf]
    %v125 = vld [vmem:[#allocation2 + $0x30] sm:$0xf]
    %v126 = vld [vmem:[#allocation2 + $0x34] sm:$0xf]
    %v127 = vld [vmem:[#allocation2 + $0x38] sm:$0xf]
    %v128 = vld [vmem:[#allocation2 + $0x3c] sm:$0xf]
    %v129 = vld [vmem:[%s4] sm:$0x1]
    %v131 = vlaneseq
    %v132 = vshrl.u32 %v131, 7
    %v133 = vsub.s32 0, %v132
    %v134 = vrot.slane %v129, %v133
    %v152 = vunpack.c.l.b16 %v113
    %v153 = vunpack.c.l.b16 %v114
    %v154 = vunpack.c.l.b16 %v115
    %v155 = vunpack.c.l.b16 %v116
    %v156 = vunpack.c.l.b16 %v117
    %v157 = vunpack.c.l.b16 %v118
    %v158 = vunpack.c.l.b16 %v119
    %v159 = vunpack.c.l.b16 %v120
    %v160 = vunpack.c.l.b16 %v121
    %v161 = vunpack.c.l.b16 %v122
    %v162 = vunpack.c.l.b16 %v123
    %v163 = vunpack.c.l.b16 %v124
    %v164 = vunpack.c.l.b16 %v125
    %v165 = vunpack.c.l.b16 %v126
    %v166 = vunpack.c.l.b16 %v127
    %v167 = vunpack.c.l.b16 %v128
    %v168 = vpack.c.b16 %v153, %v152
    %v169 = vpack.c.b16 %v155, %v154
    %v170 = vpack.c.b16 %v157, %v156
    %v171 = vpack.c.b16 %v159, %v158
    %v172 = vpack.c.b16 %v161, %v160
    %v173 = vpack.c.b16 %v163, %v162
    %v174 = vpack.c.b16 %v165, %v164
    %v175 = vpack.c.b16 %v167, %v166
    %184 = vmatprep.subr.bf16.mxu0 0
    %185 = vmatpush1.bf16.msra.mxu0 %v175
    %186 = vmatprep.subr.bf16.mxu0 0
    %187 = vmatpush1.bf16.msra.mxu0 %v174
    %188 = vmatprep.subr.bf16.mxu0 0
    %189 = vmatpush1.bf16.msra.mxu0 %v173
    %190 = vmatprep.subr.bf16.mxu0 0
    %191 = vmatpush1.bf16.msra.mxu0 %v172
    %192 = vmatprep.subr.bf16.mxu0 0
    %193 = vmatpush1.bf16.msra.mxu0 %v171
    %194 = vmatprep.subr.bf16.mxu0 0
    %195 = vmatpush1.bf16.msra.mxu0 %v170
    %196 = vmatprep.subr.bf16.mxu0 0
    %197 = vmatpush1.bf16.msra.mxu0 %v169
    %198 = vmatprep.subr.bf16.mxu0 0
    %199 = vmatpush1.bf16.msra.mxu0 %v168
    %200 = vmatprep.subr.bf16.mxu0 0
    %201 = vmatpush2.bf16.msra.mxu0 0
    %202 = vmatprep.subr.bf16.mxu0 0
    %203 = vmatpush2.bf16.msra.mxu0 0
    %204 = vmatprep.subr.bf16.mxu0 0
    %205 = vmatpush2.bf16.msra.mxu0 0
    %206 = vmatprep.subr.bf16.mxu0 0
    %207 = vmatpush2.bf16.msra.mxu0 0
    %208 = vmatprep.subr.bf16.mxu0 0
    %209 = vmatpush2.bf16.msra.mxu0 0
    %210 = vmatprep.subr.bf16.mxu0 0
    %211 = vmatpush2.bf16.msra.mxu0 0
    %212 = vmatprep.subr.bf16.mxu0 0
    %213 = vmatpush2.bf16.msra.mxu0 0
    %214 = vmatprep.subr.bf16.mxu0 0
    %215 = vmatpush2.bf16.msra.mxu0 0
    %216 = vmatprep.mubr.bf16.mxu0 0
    %217 = vmatmul.mubr.bf16.gmra.mxu0 %v112
    %v218 = vpop.f32.mrf.mxu0
    %v219 = vadd.f32 %v134, %v218
    %v220 = vpop.f32.mrf.mxu0
    %v221 = vpop.f32.mrf.mxu0
    %v222 = vadd.f32 %v134, %v221
    %v223 = vpop.f32.mrf.mxu0
    %224 = vdwg.mxu0
    %225 = vst [vmem:[%s5] sm:$0xff] %v219
    %226 = vst [vmem:[%s5 + $0x8] sm:$0xff] %v222
    // Predicated region
    $region26: #{mlp_forward.1} parent=1 // pred_check
      _
    $region27: #{mlp_forward.1} parent=1 // pred_check_branch
      %228 = sbr.rel (0) target = $region29
    $region28: #{mlp_forward.1} parent=1 // pred_region
      _
    $region29: #{mlp_forward.1} parent=1 // pred_fallthru
      _
    // Predicated region
    $region30: #{mlp_forward.1} parent=1 // pred_check
      _
    $region31: #{mlp_forward.1} parent=1 // pred_check_branch
      %230 = sbr.rel (0) target = $region33
    $region32: #{mlp_forward.1} parent=1 // pred_region
      _
    $region33: #{mlp_forward.1} parent=1 // pred_fallthru
      _
    %231 = vsyncpa [#allocation3], 1

</llo_original>
